<compile_context>
chip_gen: v7x
topology: tpu7x:2x2x1
jax: 0.10.0
libtpu: 0.0.40
codegen_flags: <defaults>
</compile_context>

<pallas_src>
from functools import partial

import numpy as np
import jax
import jax.numpy as jnp
from jax.experimental import pallas as pl
from jax.experimental.pallas import tpu as pltpu


def _dilated_block_kernel(x_ref, scale_ref, shift_ref,
                          w1_ref, w2_ref, mask1_ref, mask2_ref,
                          out_ref, patches_ref, *, H, W, C, dil):
    """One batch element: BN -> ReLU -> conv3x3 -> ReLU -> dilated conv3x3 -> +residual."""
    HW = H * W

    # Constant "ones" row of the im2col matrix (folds the conv bias into the
    # matmul).  Re-written each step (a single 1xHW row, trivially cheap) so it
    # is correct no matter how the parallel batch axis is split across cores.
    patches_ref[9 * C:9 * C + 1, :] = jnp.ones((1, HW), jnp.float32)

    x = x_ref[0].astype(jnp.float32)                       # (C, H*W), lane-dense

    # BatchNorm2d (eval: running stats folded into scale/shift) + ReLU
    t = jnp.maximum(x * scale_ref[...] + shift_ref[...], 0.0)

    def conv3x3(inp, w_ref, mask_ref, d):
        # Build the (9*C + 1, H*W) im2col patch matrix: each of the 9 taps is a
        # lane-roll of the flattened plane times a precomputed border mask
        # (exactly reproduces 'same' zero padding for a 3x3 conv of dilation d).
        for kh in range(3):
            for kw in range(3):
                t_idx = kh * 3 + kw
                s = ((kh - 1) * W + (kw - 1)) * d          # flattened source offset
                rolled = inp if s == 0 else pltpu.roll(inp, shift=(-s) % HW, axis=1)
                patches_ref[t_idx * C:(t_idx + 1) * C, :] = (
                    rolled * mask_ref[t_idx:t_idx + 1, :])
        # Single MXU matmul per conv: (C, 9C+1) x (9C+1, H*W); bias folded in.
        return jnp.dot(w_ref[...], patches_ref[...],
                       preferred_element_type=jnp.float32)

    # conv1 (dilation 1) -> Dropout2d (identity at eval) -> ReLU
    t = jnp.maximum(conv3x3(t, w1_ref, mask1_ref, 1), 0.0)

    # residual conv, dilation selected by the module's `dilation % 3` branch
    t = conv3x3(t, w2_ref, mask2_ref, dil)

    # residual add
    out_ref[0] = (t + x).astype(out_ref.dtype)


def _border_masks(H, W, d):
    """(9, H*W) {0,1} masks marking in-bounds source pixels for each 3x3 tap."""
    r = jnp.arange(H * W, dtype=jnp.int32) // W
    c = jnp.arange(H * W, dtype=jnp.int32) % W
    masks = []
    for kh in range(3):
        for kw in range(3):
            dh, dw = (kh - 1) * d, (kw - 1) * d
            ok = (r + dh >= 0) & (r + dh < H) & (c + dw >= 0) & (c + dw < W)
            masks.append(ok)
    return jnp.stack(masks, axis=0).astype(jnp.float32)


def _fold_conv_weight(w_torch, b):
    """torch (Cout, Cin, 3, 3) + (Cout,) -> (Cout, 9*Cin + 1), bias as last column."""
    cout, cin = w_torch.shape[0], w_torch.shape[1]
    w2d = jnp.transpose(w_torch, (0, 2, 3, 1)).reshape(cout, 9 * cin)
    return jnp.concatenate([w2d, b.reshape(cout, 1)], axis=1).astype(jnp.float32)


def dilated_with_dropout(x_nchw, params, dilation):
    """Pallas implementation of DilatedWithDropout.forward (eval mode). Input/output NCHW."""
    N, C, H, W = x_nchw.shape
    HW = H * W
    eps = 1e-5

    # Fold BN running stats into per-channel scale/shift (column vectors so they
    # broadcast along the lane-dense H*W axis inside the kernel).
    inv_std = 1.0 / jnp.sqrt(params['var'].astype(jnp.float32) + eps)
    scale = (params['gamma'] * inv_std).reshape(C, 1).astype(jnp.float32)
    shift = (params['beta'] - params['mean'] * params['gamma'] * inv_std
             ).reshape(C, 1).astype(jnp.float32)

    # Branch selection (static, mirrors the module's if/elif/else).
    if dilation % 3 == 0:
        w2_t, b2, d = params['rconv1_w'], params['rconv1_b'], 1
    elif dilation % 3 == 1:
        w2_t, b2, d = params['rconv2_w'], params['rconv2_b'], 2
    else:
        w2_t, b2, d = params['rconv4_w'], params['rconv4_b'], 4

    w1 = _fold_conv_weight(params['conv1_w'], params['conv1_b'])   # (C, 9C+1)
    w2 = _fold_conv_weight(w2_t, b2)                               # (C, 9C+1)
    mask1 = _border_masks(H, W, 1)                                 # (9, HW)
    mask2 = _border_masks(H, W, d)                                 # (9, HW)

    # Keep the activation in its HBM dtype (e.g. bf16) and upcast in-kernel;
    # NCHW flattens to (N, C, H*W) with no transpose.
    x_flat = x_nchw.reshape(N, C, HW)

    kernel = partial(_dilated_block_kernel, H=H, W=W, C=C, dil=d)

    out_flat = pl.pallas_call(
        kernel,
        out_shape=jax.ShapeDtypeStruct((N, C, HW), x_nchw.dtype),
        grid_spec=pltpu.PrefetchScalarGridSpec(
            num_scalar_prefetch=0,
            grid=(N,),
            in_specs=[
                pl.BlockSpec((1, C, HW), lambda n: (n, 0, 0)),      # x (residual)
                pl.BlockSpec((C, 1), lambda n: (0, 0)),             # BN scale
                pl.BlockSpec((C, 1), lambda n: (0, 0)),             # BN shift
                pl.BlockSpec((C, 9 * C + 1), lambda n: (0, 0)),     # conv1 weight|bias
                pl.BlockSpec((C, 9 * C + 1), lambda n: (0, 0)),     # residual conv weight|bias
                pl.BlockSpec((9, HW), lambda n: (0, 0)),            # tap masks, dilation 1
                pl.BlockSpec((9, HW), lambda n: (0, 0)),            # tap masks, dilation d
            ],
            out_specs=pl.BlockSpec((1, C, HW), lambda n: (n, 0, 0)),
            scratch_shapes=[
                pltpu.VMEM((9 * C + 1, HW), jnp.float32),           # shared im2col buffer
            ],
        ),
        # Batch elements are independent -> megacore (v7x) can split the grid.
        compiler_params=pltpu.CompilerParams(dimension_semantics=("parallel",)),
    )(x_flat, scale, shift, w1, w2, mask1, mask2)

    return out_flat.reshape(N, C, H, W)


def ref_forward(x_nchw, params, dilation):
    """Pure-JAX reference (NHWC via lax.conv_general_dilated) for correctness check."""
    eps = 1e-5
    scale = params['gamma'] / jnp.sqrt(params['var'] + eps)
    shift = params['beta'] - params['mean'] * scale
    x = jnp.transpose(x_nchw, (0, 2, 3, 1)).astype(jnp.float32)
    t = jnp.maximum(x * scale + shift, 0.0)

    def conv(inp, w_torch, b, d):
        w = jnp.transpose(w_torch, (2, 3, 1, 0))
        y = jax.lax.conv_general_dilated(
            inp, w, window_strides=(1, 1), padding='SAME', rhs_dilation=(d, d),
            dimension_numbers=('NHWC', 'HWIO', 'NHWC'))
        return y + b

    t = conv(t, params['conv1_w'], params['conv1_b'], 1)
    t = jnp.maximum(t, 0.0)
    if dilation % 3 == 0:
        t = conv(t, params['rconv1_w'], params['rconv1_b'], 1)
    elif dilation % 3 == 1:
        t = conv(t, params['rconv2_w'], params['rconv2_b'], 2)
    else:
        t = conv(t, params['rconv4_w'], params['rconv4_b'], 4)
    out = t + x
    return jnp.transpose(out, (0, 3, 1, 2))


if __name__ == "__main__":
    key = jax.random.PRNGKey(0)
    N, C, H, W = 2, 4, 16, 16
    dilation = 2   # module arg: dilation % 3 == 2 -> residualConv4 (conv dilation = 4)

    keys = jax.random.split(key, 14)

    def rnd(k, shape, s=0.1):
        return (s * jax.random.normal(k, shape)).astype(jnp.float32)

    params = dict(
        gamma=1.0 + rnd(keys[0], (C,)),
        beta=rnd(keys[1], (C,)),
        mean=rnd(keys[2], (C,)),
        var=(1.0 + 0.1 * jax.random.uniform(keys[3], (C,))).astype(jnp.float32),
        conv1_w=rnd(keys[4], (C, C, 3, 3)),  conv1_b=rnd(keys[5], (C,)),
        rconv1_w=rnd(keys[6], (C, C, 3, 3)), rconv1_b=rnd(keys[7], (C,)),
        rconv2_w=rnd(keys[8], (C, C, 3, 3)), rconv2_b=rnd(keys[9], (C,)),
        rconv4_w=rnd(keys[10], (C, C, 3, 3)), rconv4_b=rnd(keys[11], (C,)),
    )
    x = rnd(keys[12], (N, C, H, W), s=1.0)

    out = dilated_with_dropout(x, params, dilation)
    out = jax.block_until_ready(out)

    ref = ref_forward(x, params, dilation)
    assert out.shape == x.shape
    np.testing.assert_allclose(np.asarray(out), np.asarray(ref), rtol=1e-4, atol=1e-4)
    print("KERNEL_OK")
</pallas_src>

<mosaic_0001>
module attributes {stable_mosaic.version = 11 : i64} {
  func.func @_dilated_block_kernel(%arg0: i32, %arg1: memref<1x4x256xf32, #tpu.memory_space<vmem>>, %arg2: memref<4x1xf32, #tpu.memory_space<vmem>>, %arg3: memref<4x1xf32, #tpu.memory_space<vmem>>, %arg4: memref<4x37xf32, #tpu.memory_space<vmem>>, %arg5: memref<4x37xf32, #tpu.memory_space<vmem>>, %arg6: memref<9x256xf32, #tpu.memory_space<vmem>>, %arg7: memref<9x256xf32, #tpu.memory_space<vmem>>, %arg8: memref<1x4x256xf32, #tpu.memory_space<vmem>>, %arg9: memref<37x256xf32, #tpu.memory_space<vmem>>) attributes {dimension_semantics = [#tpu.dimension_semantics<parallel>], iteration_bounds = array<i64: 2>, scalar_prefetch = 0 : i64, scratch_operands = 1 : i64, tpu.core_type = #tpu.core_type<tc>, window_params = [{transform_indices = @transform_0, window_bounds = array<i64: 1, 4, 256>}, {pipeline_mode = #tpu.pipeline_mode<synchronous>, transform_indices = @transform_1, window_bounds = array<i64: 4, 1>}, {pipeline_mode = #tpu.pipeline_mode<synchronous>, transform_indices = @transform_2, window_bounds = array<i64: 4, 1>}, {pipeline_mode = #tpu.pipeline_mode<synchronous>, transform_indices = @transform_3, window_bounds = array<i64: 4, 37>}, {pipeline_mode = #tpu.pipeline_mode<synchronous>, transform_indices = @transform_4, window_bounds = array<i64: 4, 37>}, {pipeline_mode = #tpu.pipeline_mode<synchronous>, transform_indices = @transform_5, window_bounds = array<i64: 9, 256>}, {pipeline_mode = #tpu.pipeline_mode<synchronous>, transform_indices = @transform_6, window_bounds = array<i64: 9, 256>}, {transform_indices = @transform_7, window_bounds = array<i64: 1, 4, 256>}]} {
    %cst = arith.constant 1.000000e+00 : f32
    %0 = vector.broadcast %cst : f32 to vector<1x256xf32>
    %c36 = arith.constant 36 : index
    %c0 = arith.constant 0 : index
    %1 = vector.load %arg9[%c36, %c0] : memref<37x256xf32, #tpu.memory_space<vmem>>, vector<1x256xf32>
    tpu.vector_store %arg9[%c36, %c0], %0 {strides = array<i32>} : memref<37x256xf32, #tpu.memory_space<vmem>>, vector<1x256xf32>,
    %c0_0 = arith.constant 0 : index
    %c0_1 = arith.constant 0 : index
    %c0_2 = arith.constant 0 : index
    %2 = vector.load %arg1[%c0_0, %c0_1, %c0_2] : memref<1x4x256xf32, #tpu.memory_space<vmem>>, vector<1x4x256xf32>
    %3 = vector.shape_cast %2 : vector<1x4x256xf32> to vector<4x256xf32>
    %c0_3 = arith.constant 0 : index
    %c0_4 = arith.constant 0 : index
    %4 = vector.load %arg2[%c0_3, %c0_4] : memref<4x1xf32, #tpu.memory_space<vmem>>, vector<4x1xf32>
    %5 = vector.broadcast %4 : vector<4x1xf32> to vector<4x256xf32>
    %6 = arith.mulf %3, %5 : vector<4x256xf32>
    %c0_5 = arith.constant 0 : index
    %c0_6 = arith.constant 0 : index
    %7 = vector.load %arg3[%c0_5, %c0_6] : memref<4x1xf32, #tpu.memory_space<vmem>>, vector<4x1xf32>
    %8 = vector.broadcast %7 : vector<4x1xf32> to vector<4x256xf32>
    %9 = arith.addf %6, %8 : vector<4x256xf32>
    %cst_7 = arith.constant 0.000000e+00 : f32
    %10 = vector.broadcast %cst_7 : f32 to vector<4x256xf32>
    %11 = arith.maximumf %9, %10 : vector<4x256xf32>
    %c17_i32 = arith.constant 17 : i32
    %12 = tpu.dynamic_rotate %11 by %c17_i32 dim 1 : vector<4x256xf32>, i32 -> vector<4x256xf32>
    %c0_8 = arith.constant 0 : index
    %c0_9 = arith.constant 0 : index
    %13 = vector.load %arg6[%c0_8, %c0_9] : memref<9x256xf32, #tpu.memory_space<vmem>>, vector<1x256xf32>
    %14 = vector.broadcast %13 : vector<1x256xf32> to vector<4x256xf32>
    %15 = arith.mulf %12, %14 : vector<4x256xf32>
    %c0_10 = arith.constant 0 : index
    %c0_11 = arith.constant 0 : index
    %16 = vector.load %arg9[%c0_10, %c0_11] : memref<37x256xf32, #tpu.memory_space<vmem>>, vector<4x256xf32>
    tpu.vector_store %arg9[%c0_10, %c0_11], %15 {strides = array<i32>} : memref<37x256xf32, #tpu.memory_space<vmem>>, vector<4x256xf32>,
    %c16_i32 = arith.constant 16 : i32
    %17 = tpu.dynamic_rotate %11 by %c16_i32 dim 1 : vector<4x256xf32>, i32 -> vector<4x256xf32>
    %c1 = arith.constant 1 : index
    %c0_12 = arith.constant 0 : index
    %18 = vector.load %arg6[%c1, %c0_12] : memref<9x256xf32, #tpu.memory_space<vmem>>, vector<1x256xf32>
    %19 = vector.broadcast %18 : vector<1x256xf32> to vector<4x256xf32>
    %20 = arith.mulf %17, %19 : vector<4x256xf32>
    %c4 = arith.constant 4 : index
    %c0_13 = arith.constant 0 : index
    %21 = vector.load %arg9[%c4, %c0_13] : memref<37x256xf32, #tpu.memory_space<vmem>>, vector<4x256xf32>
    tpu.vector_store %arg9[%c4, %c0_13], %20 {strides = array<i32>} : memref<37x256xf32, #tpu.memory_space<vmem>>, vector<4x256xf32>,
    %c15_i32 = arith.constant 15 : i32
    %22 = tpu.dynamic_rotate %11 by %c15_i32 dim 1 : vector<4x256xf32>, i32 -> vector<4x256xf32>
    %c2 = arith.constant 2 : index
    %c0_14 = arith.constant 0 : index
    %23 = vector.load %arg6[%c2, %c0_14] : memref<9x256xf32, #tpu.memory_space<vmem>>, vector<1x256xf32>
    %24 = vector.broadcast %23 : vector<1x256xf32> to vector<4x256xf32>
    %25 = arith.mulf %22, %24 : vector<4x256xf32>
    %c8 = arith.constant 8 : index
    %c0_15 = arith.constant 0 : index
    %26 = vector.load %arg9[%c8, %c0_15] : memref<37x256xf32, #tpu.memory_space<vmem>>, vector<4x256xf32>
    tpu.vector_store %arg9[%c8, %c0_15], %25 {strides = array<i32>} : memref<37x256xf32, #tpu.memory_space<vmem>>, vector<4x256xf32>,
    %c1_i32 = arith.constant 1 : i32
    %27 = tpu.dynamic_rotate %11 by %c1_i32 dim 1 : vector<4x256xf32>, i32 -> vector<4x256xf32>
    %c3 = arith.constant 3 : index
    %c0_16 = arith.constant 0 : index
    %28 = vector.load %arg6[%c3, %c0_16] : memref<9x256xf32, #tpu.memory_space<vmem>>, vector<1x256xf32>
    %29 = vector.broadcast %28 : vector<1x256xf32> to vector<4x256xf32>
    %30 = arith.mulf %27, %29 : vector<4x256xf32>
    %c12 = arith.constant 12 : index
    %c0_17 = arith.constant 0 : index
    %31 = vector.load %arg9[%c12, %c0_17] : memref<37x256xf32, #tpu.memory_space<vmem>>, vector<4x256xf32>
    tpu.vector_store %arg9[%c12, %c0_17], %30 {strides = array<i32>} : memref<37x256xf32, #tpu.memory_space<vmem>>, vector<4x256xf32>,
    %c4_18 = arith.constant 4 : index
    %c0_19 = arith.constant 0 : index
    %32 = vector.load %arg6[%c4_18, %c0_19] : memref<9x256xf32, #tpu.memory_space<vmem>>, vector<1x256xf32>
    %33 = vector.broadcast %32 : vector<1x256xf32> to vector<4x256xf32>
    %34 = arith.mulf %11, %33 : vector<4x256xf32>
    %c16 = arith.constant 16 : index
    %c0_20 = arith.constant 0 : index
    %35 = vector.load %arg9[%c16, %c0_20] : memref<37x256xf32, #tpu.memory_space<vmem>>, vector<4x256xf32>
    tpu.vector_store %arg9[%c16, %c0_20], %34 {strides = array<i32>} : memref<37x256xf32, #tpu.memory_space<vmem>>, vector<4x256xf32>,
    %c255_i32 = arith.constant 255 : i32
    %36 = tpu.dynamic_rotate %11 by %c255_i32 dim 1 : vector<4x256xf32>, i32 -> vector<4x256xf32>
    %c5 = arith.constant 5 : index
    %c0_21 = arith.constant 0 : index
    %37 = vector.load %arg6[%c5, %c0_21] : memref<9x256xf32, #tpu.memory_space<vmem>>, vector<1x256xf32>
    %38 = vector.broadcast %37 : vector<1x256xf32> to vector<4x256xf32>
    %39 = arith.mulf %36, %38 : vector<4x256xf32>
    %c20 = arith.constant 20 : index
    %c0_22 = arith.constant 0 : index
    %40 = vector.load %arg9[%c20, %c0_22] : memref<37x256xf32, #tpu.memory_space<vmem>>, vector<4x256xf32>
    tpu.vector_store %arg9[%c20, %c0_22], %39 {strides = array<i32>} : memref<37x256xf32, #tpu.memory_space<vmem>>, vector<4x256xf32>,
    %c241_i32 = arith.constant 241 : i32
    %41 = tpu.dynamic_rotate %11 by %c241_i32 dim 1 : vector<4x256xf32>, i32 -> vector<4x256xf32>
    %c6 = arith.constant 6 : index
    %c0_23 = arith.constant 0 : index
    %42 = vector.load %arg6[%c6, %c0_23] : memref<9x256xf32, #tpu.memory_space<vmem>>, vector<1x256xf32>
    %43 = vector.broadcast %42 : vector<1x256xf32> to vector<4x256xf32>
    %44 = arith.mulf %41, %43 : vector<4x256xf32>
    %c24 = arith.constant 24 : index
    %c0_24 = arith.constant 0 : index
    %45 = vector.load %arg9[%c24, %c0_24] : memref<37x256xf32, #tpu.memory_space<vmem>>, vector<4x256xf32>
    tpu.vector_store %arg9[%c24, %c0_24], %44 {strides = array<i32>} : memref<37x256xf32, #tpu.memory_space<vmem>>, vector<4x256xf32>,
    %c240_i32 = arith.constant 240 : i32
    %46 = tpu.dynamic_rotate %11 by %c240_i32 dim 1 : vector<4x256xf32>, i32 -> vector<4x256xf32>
    %c7 = arith.constant 7 : index
    %c0_25 = arith.constant 0 : index
    %47 = vector.load %arg6[%c7, %c0_25] : memref<9x256xf32, #tpu.memory_space<vmem>>, vector<1x256xf32>
    %48 = vector.broadcast %47 : vector<1x256xf32> to vector<4x256xf32>
    %49 = arith.mulf %46, %48 : vector<4x256xf32>
    %c28 = arith.constant 28 : index
    %c0_26 = arith.constant 0 : index
    %50 = vector.load %arg9[%c28, %c0_26] : memref<37x256xf32, #tpu.memory_space<vmem>>, vector<4x256xf32>
    tpu.vector_store %arg9[%c28, %c0_26], %49 {strides = array<i32>} : memref<37x256xf32, #tpu.memory_space<vmem>>, vector<4x256xf32>,
    %c239_i32 = arith.constant 239 : i32
    %51 = tpu.dynamic_rotate %11 by %c239_i32 dim 1 : vector<4x256xf32>, i32 -> vector<4x256xf32>
    %c8_27 = arith.constant 8 : index
    %c0_28 = arith.constant 0 : index
    %52 = vector.load %arg6[%c8_27, %c0_28] : memref<9x256xf32, #tpu.memory_space<vmem>>, vector<1x256xf32>
    %53 = vector.broadcast %52 : vector<1x256xf32> to vector<4x256xf32>
    %54 = arith.mulf %51, %53 : vector<4x256xf32>
    %c32 = arith.constant 32 : index
    %c0_29 = arith.constant 0 : index
    %55 = vector.load %arg9[%c32, %c0_29] : memref<37x256xf32, #tpu.memory_space<vmem>>, vector<4x256xf32>
    tpu.vector_store %arg9[%c32, %c0_29], %54 {strides = array<i32>} : memref<37x256xf32, #tpu.memory_space<vmem>>, vector<4x256xf32>,
    %c0_30 = arith.constant 0 : index
    %c0_31 = arith.constant 0 : index
    %56 = vector.load %arg4[%c0_30, %c0_31] : memref<4x37xf32, #tpu.memory_space<vmem>>, vector<4x37xf32>
    %c0_32 = arith.constant 0 : index
    %c0_33 = arith.constant 0 : index
    %57 = vector.load %arg9[%c0_32, %c0_33] : memref<37x256xf32, #tpu.memory_space<vmem>>, vector<37x256xf32>
    %cst_34 = arith.constant dense<0.000000e+00> : vector<4x256xf32>
    %58 = tpu.matmul %56, %57, %cst_34 {dimension_numbers = #tpu.dot_dimension_numbers<[1], [0], [0], [1], [0, 0, 1, 1], [], []>} : vector<4x37xf32>, vector<37x256xf32>, vector<4x256xf32> -> vector<4x256xf32>
    %cst_35 = arith.constant 0.000000e+00 : f32
    %59 = vector.broadcast %cst_35 : f32 to vector<4x256xf32>
    %60 = arith.maximumf %58, %59 : vector<4x256xf32>
    %c68_i32 = arith.constant 68 : i32
    %61 = tpu.dynamic_rotate %60 by %c68_i32 dim 1 : vector<4x256xf32>, i32 -> vector<4x256xf32>
    %c0_36 = arith.constant 0 : index
    %c0_37 = arith.constant 0 : index
    %62 = vector.load %arg7[%c0_36, %c0_37] : memref<9x256xf32, #tpu.memory_space<vmem>>, vector<1x256xf32>
    %63 = vector.broadcast %62 : vector<1x256xf32> to vector<4x256xf32>
    %64 = arith.mulf %61, %63 : vector<4x256xf32>
    %c0_38 = arith.constant 0 : index
    %c0_39 = arith.constant 0 : index
    %65 = vector.load %arg9[%c0_38, %c0_39] : memref<37x256xf32, #tpu.memory_space<vmem>>, vector<4x256xf32>
    tpu.vector_store %arg9[%c0_38, %c0_39], %64 {strides = array<i32>} : memref<37x256xf32, #tpu.memory_space<vmem>>, vector<4x256xf32>,
    %c64_i32 = arith.constant 64 : i32
    %66 = tpu.dynamic_rotate %60 by %c64_i32 dim 1 : vector<4x256xf32>, i32 -> vector<4x256xf32>
    %c1_40 = arith.constant 1 : index
    %c0_41 = arith.constant 0 : index
    %67 = vector.load %arg7[%c1_40, %c0_41] : memref<9x256xf32, #tpu.memory_space<vmem>>, vector<1x256xf32>
    %68 = vector.broadcast %67 : vector<1x256xf32> to vector<4x256xf32>
    %69 = arith.mulf %66, %68 : vector<4x256xf32>
    %c4_42 = arith.constant 4 : index
    %c0_43 = arith.constant 0 : index
    %70 = vector.load %arg9[%c4_42, %c0_43] : memref<37x256xf32, #tpu.memory_space<vmem>>, vector<4x256xf32>
    tpu.vector_store %arg9[%c4_42, %c0_43], %69 {strides = array<i32>} : memref<37x256xf32, #tpu.memory_space<vmem>>, vector<4x256xf32>,
    %c60_i32 = arith.constant 60 : i32
    %71 = tpu.dynamic_rotate %60 by %c60_i32 dim 1 : vector<4x256xf32>, i32 -> vector<4x256xf32>
    %c2_44 = arith.constant 2 : index
    %c0_45 = arith.constant 0 : index
    %72 = vector.load %arg7[%c2_44, %c0_45] : memref<9x256xf32, #tpu.memory_space<vmem>>, vector<1x256xf32>
    %73 = vector.broadcast %72 : vector<1x256xf32> to vector<4x256xf32>
    %74 = arith.mulf %71, %73 : vector<4x256xf32>
    %c8_46 = arith.constant 8 : index
    %c0_47 = arith.constant 0 : index
    %75 = vector.load %arg9[%c8_46, %c0_47] : memref<37x256xf32, #tpu.memory_space<vmem>>, vector<4x256xf32>
    tpu.vector_store %arg9[%c8_46, %c0_47], %74 {strides = array<i32>} : memref<37x256xf32, #tpu.memory_space<vmem>>, vector<4x256xf32>,
    %c4_i32 = arith.constant 4 : i32
    %76 = tpu.dynamic_rotate %60 by %c4_i32 dim 1 : vector<4x256xf32>, i32 -> vector<4x256xf32>
    %c3_48 = arith.constant 3 : index
    %c0_49 = arith.constant 0 : index
    %77 = vector.load %arg7[%c3_48, %c0_49] : memref<9x256xf32, #tpu.memory_space<vmem>>, vector<1x256xf32>
    %78 = vector.broadcast %77 : vector<1x256xf32> to vector<4x256xf32>
    %79 = arith.mulf %76, %78 : vector<4x256xf32>
    %c12_50 = arith.constant 12 : index
    %c0_51 = arith.constant 0 : index
    %80 = vector.load %arg9[%c12_50, %c0_51] : memref<37x256xf32, #tpu.memory_space<vmem>>, vector<4x256xf32>
    tpu.vector_store %arg9[%c12_50, %c0_51], %79 {strides = array<i32>} : memref<37x256xf32, #tpu.memory_space<vmem>>, vector<4x256xf32>,
    %c4_52 = arith.constant 4 : index
    %c0_53 = arith.constant 0 : index
    %81 = vector.load %arg7[%c4_52, %c0_53] : memref<9x256xf32, #tpu.memory_space<vmem>>, vector<1x256xf32>
    %82 = vector.broadcast %81 : vector<1x256xf32> to vector<4x256xf32>
    %83 = arith.mulf %60, %82 : vector<4x256xf32>
    %c16_54 = arith.constant 16 : index
    %c0_55 = arith.constant 0 : index
    %84 = vector.load %arg9[%c16_54, %c0_55] : memref<37x256xf32, #tpu.memory_space<vmem>>, vector<4x256xf32>
    tpu.vector_store %arg9[%c16_54, %c0_55], %83 {strides = array<i32>} : memref<37x256xf32, #tpu.memory_space<vmem>>, vector<4x256xf32>,
    %c252_i32 = arith.constant 252 : i32
    %85 = tpu.dynamic_rotate %60 by %c252_i32 dim 1 : vector<4x256xf32>, i32 -> vector<4x256xf32>
    %c5_56 = arith.constant 5 : index
    %c0_57 = arith.constant 0 : index
    %86 = vector.load %arg7[%c5_56, %c0_57] : memref<9x256xf32, #tpu.memory_space<vmem>>, vector<1x256xf32>
    %87 = vector.broadcast %86 : vector<1x256xf32> to vector<4x256xf32>
    %88 = arith.mulf %85, %87 : vector<4x256xf32>
    %c20_58 = arith.constant 20 : index
    %c0_59 = arith.constant 0 : index
    %89 = vector.load %arg9[%c20_58, %c0_59] : memref<37x256xf32, #tpu.memory_space<vmem>>, vector<4x256xf32>
    tpu.vector_store %arg9[%c20_58, %c0_59], %88 {strides = array<i32>} : memref<37x256xf32, #tpu.memory_space<vmem>>, vector<4x256xf32>,
    %c196_i32 = arith.constant 196 : i32
    %90 = tpu.dynamic_rotate %60 by %c196_i32 dim 1 : vector<4x256xf32>, i32 -> vector<4x256xf32>
    %c6_60 = arith.constant 6 : index
    %c0_61 = arith.constant 0 : index
    %91 = vector.load %arg7[%c6_60, %c0_61] : memref<9x256xf32, #tpu.memory_space<vmem>>, vector<1x256xf32>
    %92 = vector.broadcast %91 : vector<1x256xf32> to vector<4x256xf32>
    %93 = arith.mulf %90, %92 : vector<4x256xf32>
    %c24_62 = arith.constant 24 : index
    %c0_63 = arith.constant 0 : index
    %94 = vector.load %arg9[%c24_62, %c0_63] : memref<37x256xf32, #tpu.memory_space<vmem>>, vector<4x256xf32>
    tpu.vector_store %arg9[%c24_62, %c0_63], %93 {strides = array<i32>} : memref<37x256xf32, #tpu.memory_space<vmem>>, vector<4x256xf32>,
    %c192_i32 = arith.constant 192 : i32
    %95 = tpu.dynamic_rotate %60 by %c192_i32 dim 1 : vector<4x256xf32>, i32 -> vector<4x256xf32>
    %c7_64 = arith.constant 7 : index
    %c0_65 = arith.constant 0 : index
    %96 = vector.load %arg7[%c7_64, %c0_65] : memref<9x256xf32, #tpu.memory_space<vmem>>, vector<1x256xf32>
    %97 = vector.broadcast %96 : vector<1x256xf32> to vector<4x256xf32>
    %98 = arith.mulf %95, %97 : vector<4x256xf32>
    %c28_66 = arith.constant 28 : index
    %c0_67 = arith.constant 0 : index
    %99 = vector.load %arg9[%c28_66, %c0_67] : memref<37x256xf32, #tpu.memory_space<vmem>>, vector<4x256xf32>
    tpu.vector_store %arg9[%c28_66, %c0_67], %98 {strides = array<i32>} : memref<37x256xf32, #tpu.memory_space<vmem>>, vector<4x256xf32>,
    %c188_i32 = arith.constant 188 : i32
    %100 = tpu.dynamic_rotate %60 by %c188_i32 dim 1 : vector<4x256xf32>, i32 -> vector<4x256xf32>
    %c8_68 = arith.constant 8 : index
    %c0_69 = arith.constant 0 : index
    %101 = vector.load %arg7[%c8_68, %c0_69] : memref<9x256xf32, #tpu.memory_space<vmem>>, vector<1x256xf32>
    %102 = vector.broadcast %101 : vector<1x256xf32> to vector<4x256xf32>
    %103 = arith.mulf %100, %102 : vector<4x256xf32>
    %c32_70 = arith.constant 32 : index
    %c0_71 = arith.constant 0 : index
    %104 = vector.load %arg9[%c32_70, %c0_71] : memref<37x256xf32, #tpu.memory_space<vmem>>, vector<4x256xf32>
    tpu.vector_store %arg9[%c32_70, %c0_71], %103 {strides = array<i32>} : memref<37x256xf32, #tpu.memory_space<vmem>>, vector<4x256xf32>,
    %c0_72 = arith.constant 0 : index
    %c0_73 = arith.constant 0 : index
    %105 = vector.load %arg5[%c0_72, %c0_73] : memref<4x37xf32, #tpu.memory_space<vmem>>, vector<4x37xf32>
    %c0_74 = arith.constant 0 : index
    %c0_75 = arith.constant 0 : index
    %106 = vector.load %arg9[%c0_74, %c0_75] : memref<37x256xf32, #tpu.memory_space<vmem>>, vector<37x256xf32>
    %cst_76 = arith.constant dense<0.000000e+00> : vector<4x256xf32>
    %107 = tpu.matmul %105, %106, %cst_76 {dimension_numbers = #tpu.dot_dimension_numbers<[1], [0], [0], [1], [0, 0, 1, 1], [], []>} : vector<4x37xf32>, vector<37x256xf32>, vector<4x256xf32> -> vector<4x256xf32>
    %108 = arith.addf %107, %3 : vector<4x256xf32>
    %c0_77 = arith.constant 0 : index
    %c0_78 = arith.constant 0 : index
    %c0_79 = arith.constant 0 : index
    %109 = vector.load %arg8[%c0_77, %c0_78, %c0_79] : memref<1x4x256xf32, #tpu.memory_space<vmem>>, vector<1x4x256xf32>
    %110 = vector.shape_cast %109 : vector<1x4x256xf32> to vector<4x256xf32>
    %111 = vector.shape_cast %108 : vector<4x256xf32> to vector<1x4x256xf32>
    tpu.vector_store %arg8[%c0_77, %c0_78, %c0_79], %111 {strides = array<i32>} : memref<1x4x256xf32, #tpu.memory_space<vmem>>, vector<1x4x256xf32>,
    return
  }
  func.func @transform_0(%arg0: i32) -> (i32, i32, i32) {
    %c0_i32 = arith.constant 0 : i32
    %c0_i32_0 = arith.constant 0 : i32
    %c0_i32_1 = arith.constant 0 : i32
    return %arg0, %c0_i32, %c0_i32_0 : i32, i32, i32
  }
  func.func @transform_1(%arg0: i32) -> (i32, i32) {
    %c0_i32 = arith.constant 0 : i32
    %c0_i32_0 = arith.constant 0 : i32
    %c0_i32_1 = arith.constant 0 : i32
    return %c0_i32, %c0_i32_0 : i32, i32
  }
  func.func @transform_2(%arg0: i32) -> (i32, i32) {
    %c0_i32 = arith.constant 0 : i32
    %c0_i32_0 = arith.constant 0 : i32
    %c0_i32_1 = arith.constant 0 : i32
    return %c0_i32, %c0_i32_0 : i32, i32
  }
  func.func @transform_3(%arg0: i32) -> (i32, i32) {
    %c0_i32 = arith.constant 0 : i32
    %c0_i32_0 = arith.constant 0 : i32
    %c0_i32_1 = arith.constant 0 : i32
    return %c0_i32, %c0_i32_0 : i32, i32
  }
  func.func @transform_4(%arg0: i32) -> (i32, i32) {
    %c0_i32 = arith.constant 0 : i32
    %c0_i32_0 = arith.constant 0 : i32
    %c0_i32_1 = arith.constant 0 : i32
    return %c0_i32, %c0_i32_0 : i32, i32
  }
  func.func @transform_5(%arg0: i32) -> (i32, i32) {
    %c0_i32 = arith.constant 0 : i32
    %c0_i32_0 = arith.constant 0 : i32
    %c0_i32_1 = arith.constant 0 : i32
    return %c0_i32, %c0_i32_0 : i32, i32
  }
  func.func @transform_6(%arg0: i32) -> (i32, i32) {
    %c0_i32 = arith.constant 0 : i32
    %c0_i32_0 = arith.constant 0 : i32
    %c0_i32_1 = arith.constant 0 : i32
    return %c0_i32, %c0_i32_0 : i32, i32
  }
  func.func @transform_7(%arg0: i32) -> (i32, i32, i32) {
    %c0_i32 = arith.constant 0 : i32
    %c0_i32_0 = arith.constant 0 : i32
    %c0_i32_1 = arith.constant 0 : i32
    return %arg0, %c0_i32, %c0_i32_0 : i32, i32, i32
  }
}

</mosaic_0001>

<llo_original>
// kernel: tpu_custom_call.1
$region0: #{tpu_custom_call.1}
  #allocation0 [shape = 'u32[]', space=smem, size = 0x4, offset = 0x4, fixed_abs, tag = 'smem constant byte address 0x4 - core index']
  #allocation1 [shape = 'u32[144,128]{1,0:T(1,128)}', space=vmem, size = 0x12000, scoped, tag = 'internal scratch']
  #allocation2 [shape = 'f32[37,256]{1,0:T(8,128)}', space=vmem, size = 0xa000, scoped, tag = 'scratch operand']
  %s0 = inlined_call_operand.hbm [shape: f32[2,4,256], index: 0, kind: input, shape index: {}]
  %s1 = inlined_call_operand.vmem [shape: f32[4,1], index: 1, kind: input, shape index: {}]
  %s2 = inlined_call_operand.vmem [shape: f32[4,1], index: 2, kind: input, shape index: {}]
  %s3 = inlined_call_operand.hbm [shape: f32[4,37], index: 3, kind: input, shape index: {}]
  %s4 = inlined_call_operand.hbm [shape: f32[4,37], index: 4, kind: input, shape index: {}]
  %s5 = inlined_call_operand.hbm [shape: f32[9,256], index: 5, kind: input, shape index: {}]
  %s6 = inlined_call_operand.vmem [shape: f32[9,256], index: 6, kind: input, shape index: {}]
  %s7 = inlined_call_operand.hbm [shape: f32[2,4,256], index: 7, kind: output, shape index: {}]
  %s8 = sld [smem:[#allocation0]]
  $region77: #{tpu_custom_call.1} parent=0
    _
  %s10 = ssub.s32 1, %s8
  %s11 = scalar_select 0, %s10, %s8
  $region1: #{tpu_custom_call.1} parent=0
    #allocation3 [shape = 'u8[8192]{0}', space=vmem, size = 0x2000, scoped, tag = 'input window, operand 0']
    #allocation4 [shape = 's32[2]{0}', space=sflag, size = 0x8, scoped, tag = 'scoped memory for tpu_custom_call.1']
    #allocation5 [shape = 's32[2]{0}', space=sflag, size = 0x8, scoped, tag = 'scoped memory for tpu_custom_call.1']
    #allocation6 [shape = 'u8[2048]{0}', space=vmem, size = 0x800, scoped, tag = 'input window, operand 3, single buffered']
    #allocation7 [shape = 's32[1]{0}', space=sflag, size = 0x4, scoped, tag = 'scoped memory for tpu_custom_call.1']
    #allocation8 [shape = 'u8[2048]{0}', space=vmem, size = 0x800, scoped, tag = 'input window, operand 4, single buffered']
    #allocation9 [shape = 'u8[16384]{0}', space=vmem, size = 0x4000, scoped, tag = 'input window, operand 5, single buffered']
    #allocation10 [shape = 's32[1]{0}', space=sflag, size = 0x4, scoped, tag = 'scoped memory for tpu_custom_call.1']
    #allocation11 [shape = 'u8[8192]{0}', space=vmem, size = 0x2000, scoped, tag = 'output window, operand 0']
    %12 = vsyncpa [#allocation4], 0
    %s13 = scalar_lea.sflag [#allocation4], 1
    %14 = vsyncpa %s13, 0
    %15 = vsyncpa [#allocation7], 0
    %16 = vsyncpa [#allocation10], 0
    %17 = vsyncpa [#allocation5], 0
    %s18 = scalar_lea.sflag [#allocation5], 1
    %19 = vsyncpa %s18, 0
    loop: start=0, step=1, limit=4
    $region2: #{tpu_custom_call.1} parent=1 // loop_pre_header
      _
    $region3: #{tpu_custom_call.1} parent=1 // loop_header
      %s21 = sphi 0, %s25
      %p22 = scmp.ge.s32.totalorder %s21, 4
      %s31 = sphi 0, %s33
      %s34 = sphi 0, %s31
      %s35 = sphi 0, %s34
      %s51 = sphi 0, %s35
      %s55 = sphi 0, %s55
      %s57 = sphi 0, %s55
      %s58 = sphi 0, %s57
      %s72 = sphi 0, %s58
      %s76 = sphi 0, %s76
      %s78 = sphi 0, %s76
      %s79 = sphi 0, %s78
      %s93 = sphi 0, %s79
      %s97 = sphi 0, %s97
      %s99 = sphi 0, %s97
      %s100 = sphi 0, %s99
      %s114 = sphi 0, %s100
      %s118 = sphi 0, %s118
      %s120 = sphi 0, %s118
      %s121 = sphi 0, %s120
      %s135 = sphi 0, %s121
      %s139 = sphi 0, %s139
      %s141 = sphi 0, %s139
      %s142 = sphi 0, %s141
      %s156 = sphi 0, %s142
      %s160 = sphi 0, %s160
      %s162 = sphi 0, %s160
      %s163 = sphi 0, %s162
      %s177 = sphi 0, %s163
      %s183 = sphi 0, %s185
      %s186 = sphi 0, %s183
      %s187 = sphi 0, %s186
      %s203 = sphi 0, %s187
    $region4: #{tpu_custom_call.1} parent=1 // loop_header_branch
      %24 = sbr.rel (%p22) target = $region8
    $region5: #{tpu_custom_call.1} parent=1 // loop_body
      %s26 = ssub.s32 %s21, 1
      %s27 = ssub.s32 %s21, 2
      %s28 = sadd.s32 %s21, 1
      %s29 = ssub.s32 %s21, %s28
      %p30 = scmp.eq.s32.totalorder %s29, 0
      %s32 = sadd.s32 %s31, 1
      %s33 = scalar_select %p30, %s31, %s32
      %p36 = pneg %p30
      %p37 = scmp.eq.s32.totalorder %s21, 1
      %p38 = por %p36, %p37
      %p39 = scmp.ne.s32.totalorder %s31, %s34
      %p40 = scmp.eq.s32.totalorder %s21, 0
      %p41 = por %p39, %p40
      %p42 = scmp.ne.s32.totalorder %s31, %s34
      %p43 = scmp.eq.s32.totalorder %s26, 1
      %p44 = por %p42, %p43
      %p45 = scmp.ne.s32.totalorder %s34, %s35
      %p46 = scmp.eq.s32.totalorder %s26, 0
      %p47 = por %p45, %p46
      %p48 = scmp.ne.s32.totalorder %s34, %s35
      %p49 = scmp.eq.s32.totalorder %s27, 1
      %p50 = por %p48, %p49
      %p52 = scmp.ne.s32.totalorder %s35, %s51
      %p53 = scmp.eq.s32.totalorder %s27, 0
      %p54 = por %p52, %p53
      %s56 = sadd.s32 %s55, 1
      %p59 = scmp.eq.s32.totalorder %s21, 1
      %p60 = scmp.ne.s32.totalorder %s55, %s57
      %p61 = scmp.eq.s32.totalorder %s21, 0
      %p62 = por %p60, %p61
      %p63 = scmp.ne.s32.totalorder %s55, %s57
      %p64 = scmp.eq.s32.totalorder %s26, 1
      %p65 = por %p63, %p64
      %p66 = scmp.ne.s32.totalorder %s57, %s58
      %p67 = scmp.eq.s32.totalorder %s26, 0
      %p68 = por %p66, %p67
      %p69 = scmp.ne.s32.totalorder %s57, %s58
      %p70 = scmp.eq.s32.totalorder %s27, 1
      %p71 = por %p69, %p70
      %p73 = scmp.ne.s32.totalorder %s58, %s72
      %p74 = scmp.eq.s32.totalorder %s27, 0
      %p75 = por %p73, %p74
      %s77 = sadd.s32 %s76, 1
      %p80 = scmp.eq.s32.totalorder %s21, 1
      %p81 = scmp.ne.s32.totalorder %s76, %s78
      %p82 = scmp.eq.s32.totalorder %s21, 0
      %p83 = por %p81, %p82
      %p84 = scmp.ne.s32.totalorder %s76, %s78
      %p85 = scmp.eq.s32.totalorder %s26, 1
      %p86 = por %p84, %p85
      %p87 = scmp.ne.s32.totalorder %s78, %s79
      %p88 = scmp.eq.s32.totalorder %s26, 0
      %p89 = por %p87, %p88
      %p90 = scmp.ne.s32.totalorder %s78, %s79
      %p91 = scmp.eq.s32.totalorder %s27, 1
      %p92 = por %p90, %p91
      %p94 = scmp.ne.s32.totalorder %s79, %s93
      %p95 = scmp.eq.s32.totalorder %s27, 0
      %p96 = por %p94, %p95
      %s98 = sadd.s32 %s97, 1
      %p101 = scmp.eq.s32.totalorder %s21, 1
      %p102 = scmp.ne.s32.totalorder %s97, %s99
      %p103 = scmp.eq.s32.totalorder %s21, 0
      %p104 = por %p102, %p103
      %p105 = scmp.ne.s32.totalorder %s97, %s99
      %p106 = scmp.eq.s32.totalorder %s26, 1
      %p107 = por %p105, %p106
      %p108 = scmp.ne.s32.totalorder %s99, %s100
      %p109 = scmp.eq.s32.totalorder %s26, 0
      %p110 = por %p108, %p109
      %p111 = scmp.ne.s32.totalorder %s99, %s100
      %p112 = scmp.eq.s32.totalorder %s27, 1
      %p113 = por %p111, %p112
      %p115 = scmp.ne.s32.totalorder %s100, %s114
      %p116 = scmp.eq.s32.totalorder %s27, 0
      %p117 = por %p115, %p116
      %s119 = sadd.s32 %s118, 1
      %p122 = scmp.eq.s32.totalorder %s21, 1
      %p123 = scmp.ne.s32.totalorder %s118, %s120
      %p124 = scmp.eq.s32.totalorder %s21, 0
      %p125 = por %p123, %p124
      %p126 = scmp.ne.s32.totalorder %s118, %s120
      %p127 = scmp.eq.s32.totalorder %s26, 1
      %p128 = por %p126, %p127
      %p129 = scmp.ne.s32.totalorder %s120, %s121
      %p130 = scmp.eq.s32.totalorder %s26, 0
      %p131 = por %p129, %p130
      %p132 = scmp.ne.s32.totalorder %s120, %s121
      %p133 = scmp.eq.s32.totalorder %s27, 1
      %p134 = por %p132, %p133
      %p136 = scmp.ne.s32.totalorder %s121, %s135
      %p137 = scmp.eq.s32.totalorder %s27, 0
      %p138 = por %p136, %p137
      %s140 = sadd.s32 %s139, 1
      %p143 = scmp.eq.s32.totalorder %s21, 1
      %p144 = scmp.ne.s32.totalorder %s139, %s141
      %p145 = scmp.eq.s32.totalorder %s21, 0
      %p146 = por %p144, %p145
      %p147 = scmp.ne.s32.totalorder %s139, %s141
      %p148 = scmp.eq.s32.totalorder %s26, 1
      %p149 = por %p147, %p148
      %p150 = scmp.ne.s32.totalorder %s141, %s142
      %p151 = scmp.eq.s32.totalorder %s26, 0
      %p152 = por %p150, %p151
      %p153 = scmp.ne.s32.totalorder %s141, %s142
      %p154 = scmp.eq.s32.totalorder %s27, 1
      %p155 = por %p153, %p154
      %p157 = scmp.ne.s32.totalorder %s142, %s156
      %p158 = scmp.eq.s32.totalorder %s27, 0
      %p159 = por %p157, %p158
      %s161 = sadd.s32 %s160, 1
      %p164 = scmp.eq.s32.totalorder %s21, 1
      %p165 = scmp.ne.s32.totalorder %s160, %s162
      %p166 = scmp.eq.s32.totalorder %s21, 0
      %p167 = por %p165, %p166
      %p168 = scmp.ne.s32.totalorder %s160, %s162
      %p169 = scmp.eq.s32.totalorder %s26, 1
      %p170 = por %p168, %p169
      %p171 = scmp.ne.s32.totalorder %s162, %s163
      %p172 = scmp.eq.s32.totalorder %s26, 0
      %p173 = por %p171, %p172
      %p174 = scmp.ne.s32.totalorder %s162, %s163
      %p175 = scmp.eq.s32.totalorder %s27, 1
      %p176 = por %p174, %p175
      %p178 = scmp.ne.s32.totalorder %s163, %s177
      %p179 = scmp.eq.s32.totalorder %s27, 0
      %p180 = por %p178, %p179
      %s181 = ssub.s32 %s21, %s28
      %p182 = scmp.eq.s32.totalorder %s181, 0
      %s184 = sadd.s32 %s183, 1
      %s185 = scalar_select %p182, %s183, %s184
      %p188 = pneg %p182
      %p189 = scmp.eq.s32.totalorder %s21, 1
      %p190 = por %p188, %p189
      %p191 = scmp.ne.s32.totalorder %s183, %s186
      %p192 = scmp.eq.s32.totalorder %s21, 0
      %p193 = por %p191, %p192
      %p194 = scmp.ne.s32.totalorder %s183, %s186
      %p195 = scmp.eq.s32.totalorder %s26, 1
      %p196 = por %p194, %p195
      %p197 = scmp.ne.s32.totalorder %s186, %s187
      %p198 = scmp.eq.s32.totalorder %s26, 0
      %p199 = por %p197, %p198
      %p200 = scmp.ne.s32.totalorder %s186, %s187
      %p201 = scmp.eq.s32.totalorder %s27, 1
      %p202 = por %p200, %p201
      %p204 = scmp.ne.s32.totalorder %s187, %s203
      %p205 = scmp.eq.s32.totalorder %s27, 0
      %p206 = por %p204, %p205
      %p207 = scmp.le.s32.totalorder 1, %s21
      %p208 = scmp.lt.s32.totalorder %s21, 3
      %p209 = pnand %p207, %p208
      %p210 = pneg %p209
      // Predicated region
      $region9: #{tpu_custom_call.1} parent=5 // pred_check
        _
      $region10: #{tpu_custom_call.1} parent=5 // pred_check_branch
        %212 = sbr.rel (%p209) target = $region12
      $region11: #{tpu_custom_call.1} parent=5 // pred_region
        %s213 = ssub.s32 %s21, 1
        // Predicated region
        $region13: #{tpu_custom_call.1} parent=11 // pred_check
          %p214 = pneg %p68
        $region14: #{tpu_custom_call.1} parent=11 // pred_check_branch
          %216 = sbr.rel (%p214) target = $region16
        $region15: #{tpu_custom_call.1} parent=11 // pred_region
          _
        $region16: #{tpu_custom_call.1} parent=11 // pred_fallthru
          _
        // Predicated region
        $region17: #{tpu_custom_call.1} parent=11 // pred_check
          %p217 = pneg %p89
        $region18: #{tpu_custom_call.1} parent=11 // pred_check_branch
          %219 = sbr.rel (%p217) target = $region20
        $region19: #{tpu_custom_call.1} parent=11 // pred_region
          _
        $region20: #{tpu_custom_call.1} parent=11 // pred_fallthru
          _
        // Predicated region
        $region21: #{tpu_custom_call.1} parent=11 // pred_check
          %p220 = pneg %p110
        $region22: #{tpu_custom_call.1} parent=11 // pred_check_branch
          %222 = sbr.rel (%p220) target = $region24
        $region23: #{tpu_custom_call.1} parent=11 // pred_region
          %s224 = ssub.s32 64, 64
          %225 = vsyncadd [#allocation7], %s224
          %s227 = sshll.u32 [#allocation6], 4
          %s228 = int_to_ptr.vmem [resolvable:$true] %s227
          %230 = dma.hbm_to_vmem [thread:$0]  %s3, 64, %s228, [#allocation7]
        $region24: #{tpu_custom_call.1} parent=11 // pred_fallthru
          _
        // Predicated region
        $region25: #{tpu_custom_call.1} parent=11 // pred_check
          %p231 = pneg %p131
        $region26: #{tpu_custom_call.1} parent=11 // pred_check_branch
          %233 = sbr.rel (%p231) target = $region28
        $region27: #{tpu_custom_call.1} parent=11 // pred_region
          %s235 = ssub.s32 64, 64
          %236 = vsyncadd [#allocation7], %s235
          %s238 = sshll.u32 [#allocation8], 4
          %s239 = int_to_ptr.vmem [resolvable:$true] %s238
          %241 = dma.hbm_to_vmem [thread:$0]  %s4, 64, %s239, [#allocation7]
        $region28: #{tpu_custom_call.1} parent=11 // pred_fallthru
          _
        // Predicated region
        $region29: #{tpu_custom_call.1} parent=11 // pred_check
          %p242 = pneg %p152
        $region30: #{tpu_custom_call.1} parent=11 // pred_check_branch
          %244 = sbr.rel (%p242) target = $region32
        $region31: #{tpu_custom_call.1} parent=11 // pred_region
          %s246 = ssub.s32 512, 512
          %247 = vsyncadd [#allocation10], %s246
          %s248 = sshll.u32 [#allocation9], 4
          %s249 = int_to_ptr.vmem [resolvable:$true] %s248
          %254 = dma.hbm_to_vmem [thread:$0]  %s5, 512, %s249, [#allocation10], 256, 256, 16
        $region32: #{tpu_custom_call.1} parent=11 // pred_fallthru
          _
        // Predicated region
        $region33: #{tpu_custom_call.1} parent=11 // pred_check
          %p255 = pneg %p173
        $region34: #{tpu_custom_call.1} parent=11 // pred_check_branch
          %257 = sbr.rel (%p255) target = $region36
        $region35: #{tpu_custom_call.1} parent=11 // pred_region
          _
        $region36: #{tpu_custom_call.1} parent=11 // pred_fallthru
          _
      $region12: #{tpu_custom_call.1} parent=5 // pred_fallthru
        _
      %p258 = scmp.lt.s32.totalorder %s21, 2
      // Predicated region
      $region37: #{tpu_custom_call.1} parent=5 // pred_check
        %p259 = pneg %p258
      $region38: #{tpu_custom_call.1} parent=5 // pred_check_branch
        %261 = sbr.rel (%p259) target = $region40
      $region39: #{tpu_custom_call.1} parent=5 // pred_region
        // Predicated region
        $region41: #{tpu_custom_call.1} parent=39 // pred_check
          %p262 = pneg %p41
        $region42: #{tpu_custom_call.1} parent=39 // pred_check_branch
          %264 = sbr.rel (%p262) target = $region44
        $region43: #{tpu_custom_call.1} parent=39 // pred_region
          %s265 = sand.u32 %s31, 1
          %s266 = scalar_lea.sflag [#allocation4], %s265
          %s267 = sand.u32 %s31, 1
          %s268 = smul.addr %s267, 8
          %s269 = scalar_lea.vmem [#allocation3], %s268
          %s271 = ssub.s32 128, 128
          %272 = vsyncadd %s266, %s271
          %s273 = smul.addr %s21, 2
          %s274 = smul.addr %s273, 64
          %s275 = scalar_lea.hbm %s0, %s274
          %s277 = sshll.u32 %s269, 4
          %s278 = int_to_ptr.vmem [resolvable:$true] %s277
          %280 = dma.hbm_to_vmem [thread:$0]  %s275, 128, %s278, %s266
        $region44: #{tpu_custom_call.1} parent=39 // pred_fallthru
          _
      $region40: #{tpu_custom_call.1} parent=5 // pred_fallthru
        _
      %p281 = scmp.le.s32.totalorder 1, %s21
      %p282 = scmp.lt.s32.totalorder %s21, 3
      %p283 = pnand %p281, %p282
      %p284 = pneg %p283
      // Predicated region
      $region45: #{tpu_custom_call.1} parent=5 // pred_check
        _
      $region46: #{tpu_custom_call.1} parent=5 // pred_check_branch
        %286 = sbr.rel (%p283) target = $region48
      $region47: #{tpu_custom_call.1} parent=5 // pred_region
        %s287 = ssub.s32 %s21, 1
        %s288 = sand.u32 %s34, 1
        %s289 = scalar_lea.sflag [#allocation4], %s288
        %s290 = sand.u32 %s34, 1
        %s291 = smul.addr %s290, 8
        %s292 = scalar_lea.vmem [#allocation3], %s291
        // Predicated region
        $region49: #{tpu_custom_call.1} parent=47 // pred_check
          %p293 = pneg %p47
        $region50: #{tpu_custom_call.1} parent=47 // pred_check_branch
          %295 = sbr.rel (%p293) target = $region52
        $region51: #{tpu_custom_call.1} parent=47 // pred_region
          %296 = dma.done %s289, 128
        $region52: #{tpu_custom_call.1} parent=47 // pred_fallthru
          _
        // Predicated region
        $region53: #{tpu_custom_call.1} parent=47 // pred_check
          %p297 = pneg %p110
        $region54: #{tpu_custom_call.1} parent=47 // pred_check_branch
          %299 = sbr.rel (%p297) target = $region56
        $region55: #{tpu_custom_call.1} parent=47 // pred_region
          %300 = dma.done [#allocation7], 64
        $region56: #{tpu_custom_call.1} parent=47 // pred_fallthru
          _
        // Predicated region
        $region57: #{tpu_custom_call.1} parent=47 // pred_check
          %p301 = pneg %p131
        $region58: #{tpu_custom_call.1} parent=47 // pred_check_branch
          %303 = sbr.rel (%p301) target = $region60
        $region59: #{tpu_custom_call.1} parent=47 // pred_region
          %304 = dma.done [#allocation7], 64
        $region60: #{tpu_custom_call.1} parent=47 // pred_fallthru
          _
        // Predicated region
        $region61: #{tpu_custom_call.1} parent=47 // pred_check
          %p305 = pneg %p152
        $region62: #{tpu_custom_call.1} parent=47 // pred_check_branch
          %307 = sbr.rel (%p305) target = $region64
        $region63: #{tpu_custom_call.1} parent=47 // pred_region
          %308 = dma.done [#allocation10], 512
        $region64: #{tpu_custom_call.1} parent=47 // pred_fallthru
          _
        %s309 = sand.u32 %s34, 1
        %s310 = scalar_lea.sflag [#allocation4], %s309
        %s311 = sand.u32 %s34, 1
        %s312 = smul.addr %s311, 8
        %s313 = scalar_lea.vmem [#allocation3], %s312
        %p314 = pneg %p47
        %p315 = pneg %p44
        %p316 = pneg %p68
        %p317 = pneg %p65
        %p318 = pneg %p89
        %p319 = pneg %p86
        %p320 = pneg %p110
        %p321 = pneg %p107
        %p322 = pneg %p131
        %p323 = pneg %p128
        %p324 = pneg %p152
        %p325 = pneg %p149
        %p326 = pneg %p173
        %p327 = pneg %p170
        %p328 = pneg %p199
        %p329 = pneg %p196
        %s330 = sand.u32 %s186, 1
        %s331 = scalar_lea.sflag [#allocation5], %s330
        %s332 = sand.u32 %s186, 1
        %s333 = smul.addr %s332, 8
        %s334 = scalar_lea.vmem [#allocation11], %s333
        %v335 = vlaneseq
        %vm336 = vcmp.ge.s32.totalorder %v335, 0
        %vm337 = vcmp.lt.s32.totalorder %v335, 256
        %vm338 = vmand %vm336, %vm337
        %s339 = scalar_lea.vmem [#allocation2], 68
        %340 = vst.msk [vmem:[%s339] ss:$8 sm:$0x3] %vm338, 1.0
        %341 = vst.msk [vmem:[%s339] ss:$8 sm:$0x0] %vm338, 1.0
        %v342 = vld [vmem:[%s292] sm:$0xff]
        %v343 = vld [vmem:[%s1] sm:$0xf]
        %345 = vset.pattern.permute.xlu0 0
        %346 = vperm.xlu0 %345, %v343
        %v347 = vpop.permute.xlu0 %346
        %v349 = vunpack.c.l.s4 839922192
        %v350 = vunpack.c.0.s8 %v349
        %v351 = vlaneseq
        %v352 = vshrl.u32 %v351, 7
        %v353 = vsub.s32 %v350, %v352
        %v354 = vrot.slane %v347, %v353
        %v356 = vmul.f32 %v342, %v354
        %v357 = vld [vmem:[%s2] sm:$0xf]
        %359 = vset.pattern.permute.xlu0 0
        %360 = vperm.xlu0 %359, %v357
        %v361 = vpop.permute.xlu0 %360
        %v363 = vunpack.c.l.s4 839922192
        %v364 = vunpack.c.0.s8 %v363
        %v365 = vlaneseq
        %v366 = vshrl.u32 %v365, 7
        %v367 = vsub.s32 %v364, %v366
        %v368 = vrot.slane %v361, %v367
        %v370 = vadd.f32 %v356, %v368
        %v371 = vmax.f32 %v370, 0.0
        %v373 = vcombine.high %v371, %v371
        %375 = vrot.lane.b32.xlu0 %v371, 17
        %v376 = vpop.permute.xlu0 %375
        %377 = vrot.lane.b32.xlu0 %v373, 17
        %v378 = vpop.permute.xlu0 %377
        %v379 = vlaneseq
        %v380 = vand.u32 %v379, 127
        %vm381 = vcmp.lt.s32.totalorder %v380, 17
        %v382 = vsel %vm381, %v376, %v378
        %v383 = vsel %vm381, %v378, %v376
        %v384 = vld [vmem:[#allocation9] ss:$8 sm:$0x3]
        %v386 = vlaneseq
        %v387 = vshrl.u32 %v386, 7
        %v388 = vsub.s32 0, %v387
        %v389 = vrot.slane %v384, %v388
        %v390 = vlaneseq
        %v391 = vshrl.u32 %v390, 7
        %v392 = vsub.s32 1, %v391
        %v393 = vrot.slane %v384, %v392
        %v396 = vmul.f32 %v383, %v389
        %v397 = vmul.f32 %v382, %v393
        %398 = vst [vmem:[#allocation2] sm:$0xf] %v396
        %399 = vst [vmem:[#allocation2 + $0x8] sm:$0xf] %v397
        %400 = vrot.lane.b32.xlu0 %v371, 16
        %v401 = vpop.permute.xlu0 %400
        %402 = vrot.lane.b32.xlu0 %v373, 16
        %v403 = vpop.permute.xlu0 %402
        %vm404 = vcmp.lt.s32.totalorder %v380, 16
        %v405 = vsel %vm404, %v401, %v403
        %v406 = vsel %vm404, %v403, %v401
        %s407 = scalar_lea.vmem [#allocation9], 1
        %v408 = vld [vmem:[%s407] ss:$8 sm:$0x3]
        %v410 = vlaneseq
        %v411 = vshrl.u32 %v410, 7
        %v412 = vsub.s32 0, %v411
        %v413 = vrot.slane %v408, %v412
        %v414 = vlaneseq
        %v415 = vshrl.u32 %v414, 7
        %v416 = vsub.s32 1, %v415
        %v417 = vrot.slane %v408, %v416
        %v420 = vmul.f32 %v406, %v413
        %v421 = vmul.f32 %v405, %v417
        %v424 = vrot.slane %v420, 4
        %v425 = vrot.slane %v421, 4
        %428 = vst [vmem:[#allocation2] sm:$0xf0] %v424
        %429 = vst [vmem:[#allocation2 + $0x8] sm:$0xf0] %v425
        %430 = vrot.lane.b32.xlu0 %v371, 15
        %v431 = vpop.permute.xlu0 %430
        %432 = vrot.lane.b32.xlu0 %v373, 15
        %v433 = vpop.permute.xlu0 %432
        %vm434 = vcmp.lt.s32.totalorder %v380, 15
        %v435 = vsel %vm434, %v431, %v433
        %v436 = vsel %vm434, %v433, %v431
        %s437 = scalar_lea.vmem [#allocation9], 2
        %v438 = vld [vmem:[%s437] ss:$8 sm:$0x3]
        %v440 = vlaneseq
        %v441 = vshrl.u32 %v440, 7
        %v442 = vsub.s32 0, %v441
        %v443 = vrot.slane %v438, %v442
        %v444 = vlaneseq
        %v445 = vshrl.u32 %v444, 7
        %v446 = vsub.s32 1, %v445
        %v447 = vrot.slane %v438, %v446
        %v450 = vmul.f32 %v436, %v443
        %v451 = vmul.f32 %v435, %v447
        %452 = vst [vmem:[#allocation2 + $0x10] sm:$0xf] %v450
        %453 = vst [vmem:[#allocation2 + $0x18] sm:$0xf] %v451
        %454 = vrot.lane.b32.xlu0 %v371, 1
        %v455 = vpop.permute.xlu0 %454
        %456 = vrot.lane.b32.xlu0 %v373, 1
        %v457 = vpop.permute.xlu0 %456
        %vm458 = vcmp.lt.s32.totalorder %v380, 1
        %v459 = vsel %vm458, %v455, %v457
        %v460 = vsel %vm458, %v457, %v455
        %s461 = scalar_lea.vmem [#allocation9], 3
        %v462 = vld [vmem:[%s461] ss:$8 sm:$0x3]
        %v464 = vlaneseq
        %v465 = vshrl.u32 %v464, 7
        %v466 = vsub.s32 0, %v465
        %v467 = vrot.slane %v462, %v466
        %v468 = vlaneseq
        %v469 = vshrl.u32 %v468, 7
        %v470 = vsub.s32 1, %v469
        %v471 = vrot.slane %v462, %v470
        %v474 = vmul.f32 %v460, %v467
        %v475 = vmul.f32 %v459, %v471
        %v478 = vrot.slane %v474, 4
        %v479 = vrot.slane %v475, 4
        %482 = vst [vmem:[#allocation2 + $0x10] sm:$0xf0] %v478
        %483 = vst [vmem:[#allocation2 + $0x18] sm:$0xf0] %v479
        %s484 = scalar_lea.vmem [#allocation9], 4
        %v485 = vld [vmem:[%s484] ss:$8 sm:$0x3]
        %v487 = vlaneseq
        %v488 = vshrl.u32 %v487, 7
        %v489 = vsub.s32 0, %v488
        %v490 = vrot.slane %v485, %v489
        %v491 = vlaneseq
        %v492 = vshrl.u32 %v491, 7
        %v493 = vsub.s32 1, %v492
        %v494 = vrot.slane %v485, %v493
        %v495 = vcombine.low %v490, %v494
        %v497 = vmul.f32 %v371, %v495
        %v499 = vcombine.high %v497, %v497
        %501 = vst [vmem:[#allocation2 + $0x20] sm:$0xf] %v497
        %502 = vst [vmem:[#allocation2 + $0x28] sm:$0xf] %v499
        %503 = vrot.lane.b32.xlu0 %v371, 127
        %v504 = vpop.permute.xlu0 %503
        %505 = vrot.lane.b32.xlu0 %v373, 127
        %v506 = vpop.permute.xlu0 %505
        %vm507 = vcmp.lt.s32.totalorder %v380, 127
        %v508 = vsel %vm507, %v504, %v506
        %v509 = vsel %vm507, %v506, %v504
        %s510 = scalar_lea.vmem [#allocation9], 5
        %v511 = vld [vmem:[%s510] ss:$8 sm:$0x3]
        %v513 = vlaneseq
        %v514 = vshrl.u32 %v513, 7
        %v515 = vsub.s32 0, %v514
        %v516 = vrot.slane %v511, %v515
        %v517 = vlaneseq
        %v518 = vshrl.u32 %v517, 7
        %v519 = vsub.s32 1, %v518
        %v520 = vrot.slane %v511, %v519
        %v523 = vmul.f32 %v508, %v516
        %v524 = vmul.f32 %v509, %v520
        %v527 = vrot.slane %v523, 4
        %v528 = vrot.slane %v524, 4
        %531 = vst [vmem:[#allocation2 + $0x20] sm:$0xf0] %v527
        %532 = vst [vmem:[#allocation2 + $0x28] sm:$0xf0] %v528
        %533 = vrot.lane.b32.xlu0 %v371, 113
        %v534 = vpop.permute.xlu0 %533
        %535 = vrot.lane.b32.xlu0 %v373, 113
        %v536 = vpop.permute.xlu0 %535
        %vm537 = vcmp.lt.s32.totalorder %v380, 113
        %v538 = vsel %vm537, %v534, %v536
        %v539 = vsel %vm537, %v536, %v534
        %s540 = scalar_lea.vmem [#allocation9], 6
        %v541 = vld [vmem:[%s540] ss:$8 sm:$0x3]
        %v543 = vlaneseq
        %v544 = vshrl.u32 %v543, 7
        %v545 = vsub.s32 0, %v544
        %v546 = vrot.slane %v541, %v545
        %v547 = vlaneseq
        %v548 = vshrl.u32 %v547, 7
        %v549 = vsub.s32 1, %v548
        %v550 = vrot.slane %v541, %v549
        %v553 = vmul.f32 %v538, %v546
        %v554 = vmul.f32 %v539, %v550
        %555 = vst [vmem:[#allocation2 + $0x30] sm:$0xf] %v553
        %556 = vst [vmem:[#allocation2 + $0x38] sm:$0xf] %v554
        %557 = vrot.lane.b32.xlu0 %v371, 112
        %v558 = vpop.permute.xlu0 %557
        %559 = vrot.lane.b32.xlu0 %v373, 112
        %v560 = vpop.permute.xlu0 %559
        %vm561 = vcmp.lt.s32.totalorder %v380, 112
        %v562 = vsel %vm561, %v558, %v560
        %v563 = vsel %vm561, %v560, %v558
        %s564 = scalar_lea.vmem [#allocation9], 7
        %v565 = vld [vmem:[%s564] ss:$8 sm:$0x3]
        %v567 = vlaneseq
        %v568 = vshrl.u32 %v567, 7
        %v569 = vsub.s32 0, %v568
        %v570 = vrot.slane %v565, %v569
        %v571 = vlaneseq
        %v572 = vshrl.u32 %v571, 7
        %v573 = vsub.s32 1, %v572
        %v574 = vrot.slane %v565, %v573
        %v577 = vmul.f32 %v562, %v570
        %v578 = vmul.f32 %v563, %v574
        %v581 = vrot.slane %v577, 4
        %v582 = vrot.slane %v578, 4
        %585 = vst [vmem:[#allocation2 + $0x30] sm:$0xf0] %v581
        %586 = vst [vmem:[#allocation2 + $0x38] sm:$0xf0] %v582
        %587 = vrot.lane.b32.xlu0 %v371, 111
        %v588 = vpop.permute.xlu0 %587
        %589 = vrot.lane.b32.xlu0 %v373, 111
        %v590 = vpop.permute.xlu0 %589
        %vm591 = vcmp.lt.s32.totalorder %v380, 111
        %v592 = vsel %vm591, %v588, %v590
        %v593 = vsel %vm591, %v590, %v588
        %s594 = scalar_lea.vmem [#allocation9], 16
        %v595 = vld [vmem:[%s594] ss:$8 sm:$0x3]
        %v597 = vlaneseq
        %v598 = vshrl.u32 %v597, 7
        %v599 = vsub.s32 0, %v598
        %v600 = vrot.slane %v595, %v599
        %v601 = vlaneseq
        %v602 = vshrl.u32 %v601, 7
        %v603 = vsub.s32 1, %v602
        %v604 = vrot.slane %v595, %v603
        %v607 = vmul.f32 %v592, %v600
        %v608 = vmul.f32 %v593, %v604
        %609 = vst [vmem:[#allocation2 + $0x40] sm:$0xf] %v607
        %610 = vst [vmem:[#allocation2 + $0x48] sm:$0xf] %v608
        %v611 = vld [vmem:[#allocation6] sm:$0xf]
        %v612 = vld [vmem:[#allocation2] sm:$0xff]
        %v613 = vld [vmem:[#allocation2 + $0x8] sm:$0xff]
        %v614 = vld [vmem:[#allocation2 + $0x10] sm:$0xff]
        %v615 = vld [vmem:[#allocation2 + $0x18] sm:$0xff]
        %v616 = vld [vmem:[#allocation2 + $0x20] sm:$0xff]
        %v617 = vld [vmem:[#allocation2 + $0x28] sm:$0xff]
        %v618 = vld [vmem:[#allocation2 + $0x30] sm:$0xff]
        %v619 = vld [vmem:[#allocation2 + $0x38] sm:$0xff]
        %v620 = vld [vmem:[#allocation2 + $0x40] sm:$0x1f]
        %v621 = vld [vmem:[#allocation2 + $0x48] sm:$0x1f]
        %vm622 = vcmask 302080
        %v624 = vsel %vm622, %v611, 0
        %vm626 = vcmask 1044480
        %v628 = vsel %vm626, %v620, 0
        %v631 = vsel %vm626, %v621, 0
        %633 = vmatprep.subr.mxu0 %v613
        %634 = vmatpush1.msra.mxu0 %v612
        %635 = vmatprep.subr.mxu0 %v615
        %636 = vmatpush1.msra.mxu0 %v614
        %637 = vmatprep.subr.mxu0 %v617
        %638 = vmatpush1.msra.mxu0 %v616
        %639 = vmatprep.subr.mxu0 %v619
        %640 = vmatpush1.msra.mxu0 %v618
        %641 = vmatprep.subr.mxu0 %v631
        %642 = vmatpush1.msra.mxu0 %v628
        %643 = vmatprep.subr.mxu0 0.0
        %644 = vmatpush1.msra.mxu0 0.0
        %645 = vmatprep.subr.mxu0 0.0
        %646 = vmatpush1.msra.mxu0 0.0
        %647 = vmatprep.subr.mxu0 0.0
        %648 = vmatpush1.msra.mxu0 0.0
        %649 = vmatprep.subr.mxu0 0.0
        %650 = vmatpush1.msra.mxu0 0.0
        %651 = vmatprep.subr.mxu0 0.0
        %652 = vmatpush1.msra.mxu0 0.0
        %653 = vmatprep.subr.mxu0 0.0
        %654 = vmatpush1.msra.mxu0 0.0
        %655 = vmatprep.subr.mxu0 0.0
        %656 = vmatpush1.msra.mxu0 0.0
        %657 = vmatprep.subr.mxu0 0.0
        %658 = vmatpush1.msra.mxu0 0.0
        %659 = vmatprep.subr.mxu0 0.0
        %660 = vmatpush1.msra.mxu0 0.0
        %661 = vmatprep.subr.mxu0 0.0
        %662 = vmatpush1.msra.mxu0 0.0
        %663 = vmatprep.subr.mxu0 0.0
        %664 = vmatpush1.msra.mxu0 0.0
        %665 = vmatprep.subr.mxu0 0.0
        %666 = vmatpush1.msra.mxu0 0.0
        %667 = vmatprep.subr.mxu0 0.0
        %668 = vmatpush1.msra.mxu0 0.0
        %669 = vmatprep.subr.mxu0 0.0
        %670 = vmatpush1.msra.mxu0 0.0
        %671 = vmatprep.subr.mxu0 0.0
        %672 = vmatpush1.msra.mxu0 0.0
        %673 = vmatprep.subr.mxu0 0.0
        %674 = vmatpush1.msra.mxu0 0.0
        %675 = vmatprep.subr.mxu0 0.0
        %676 = vmatpush1.msra.mxu0 0.0
        %677 = vmatprep.subr.mxu0 0.0
        %678 = vmatpush1.msra.mxu0 0.0
        %679 = vmatprep.subr.mxu0 0.0
        %680 = vmatpush1.msra.mxu0 0.0
        %681 = vmatprep.subr.mxu0 0.0
        %682 = vmatpush1.msra.mxu0 0.0
        %683 = vmatprep.subr.mxu0 0.0
        %684 = vmatpush1.msra.mxu0 0.0
        %685 = vmatprep.subr.mxu0 0.0
        %686 = vmatpush1.msra.mxu0 0.0
        %687 = vmatprep.subr.mxu0 0.0
        %688 = vmatpush1.msra.mxu0 0.0
        %689 = vmatprep.subr.mxu0 0.0
        %690 = vmatpush1.msra.mxu0 0.0
        %691 = vmatprep.subr.mxu0 0.0
        %692 = vmatpush1.msra.mxu0 0.0
        %693 = vmatprep.subr.mxu0 0.0
        %694 = vmatpush1.msra.mxu0 0.0
        %695 = vmatprep.subr.mxu0 0.0
        %696 = vmatpush1.msra.mxu0 0.0
        %697 = vmatprep.mubr.f32.mxu0 0.0
        %698 = vmatmul.mubr.f32.gmra.mrb[0].mxu0 %v624
        %v699 = vpop.f32.mrb[0].mxu0
        %v700 = vadd.f32 0.0, %v699
        %v701 = vpop.f32.mrb[0].mxu0
        %v702 = vadd.f32 0.0, %v701
        %703 = vdwg.mxu0
        %v704 = vmax.f32 %v700, 0.0
        %v705 = vmax.f32 %v702, 0.0
        %706 = vrot.lane.b32.xlu0 %v704, 68
        %v707 = vpop.permute.xlu0 %706
        %708 = vrot.lane.b32.xlu0 %v705, 68
        %v709 = vpop.permute.xlu0 %708
        %vm710 = vcmp.lt.s32.totalorder %v380, 68
        %v711 = vsel %vm710, %v707, %v709
        %v712 = vsel %vm710, %v709, %v707
        %v713 = vld [vmem:[%s6] ss:$8 sm:$0x3]
        %v715 = vlaneseq
        %v716 = vshrl.u32 %v715, 7
        %v717 = vsub.s32 0, %v716
        %v718 = vrot.slane %v713, %v717
        %v719 = vlaneseq
        %v720 = vshrl.u32 %v719, 7
        %v721 = vsub.s32 1, %v720
        %v722 = vrot.slane %v713, %v721
        %v725 = vmul.f32 %v712, %v718
        %v726 = vmul.f32 %v711, %v722
        %727 = vst [vmem:[#allocation2] sm:$0xf] %v725
        %728 = vst [vmem:[#allocation2 + $0x8] sm:$0xf] %v726
        %729 = vrot.lane.b32.xlu0 %v704, 64
        %v730 = vpop.permute.xlu0 %729
        %731 = vrot.lane.b32.xlu0 %v705, 64
        %v732 = vpop.permute.xlu0 %731
        %vm733 = vcmp.lt.s32.totalorder %v380, 64
        %v734 = vsel %vm733, %v730, %v732
        %v735 = vsel %vm733, %v732, %v730
        %s736 = scalar_lea.vmem %s6, 1
        %v737 = vld [vmem:[%s736] ss:$8 sm:$0x3]
        %v739 = vlaneseq
        %v740 = vshrl.u32 %v739, 7
        %v741 = vsub.s32 0, %v740
        %v742 = vrot.slane %v737, %v741
        %v743 = vlaneseq
        %v744 = vshrl.u32 %v743, 7
        %v745 = vsub.s32 1, %v744
        %v746 = vrot.slane %v737, %v745
        %v749 = vmul.f32 %v735, %v742
        %v750 = vmul.f32 %v734, %v746
        %v753 = vrot.slane %v749, 4
        %v754 = vrot.slane %v750, 4
        %757 = vst [vmem:[#allocation2] sm:$0xf0] %v753
        %758 = vst [vmem:[#allocation2 + $0x8] sm:$0xf0] %v754
        %759 = vrot.lane.b32.xlu0 %v704, 60
        %v760 = vpop.permute.xlu0 %759
        %761 = vrot.lane.b32.xlu0 %v705, 60
        %v762 = vpop.permute.xlu0 %761
        %vm763 = vcmp.lt.s32.totalorder %v380, 60
        %v764 = vsel %vm763, %v760, %v762
        %v765 = vsel %vm763, %v762, %v760
        %s766 = scalar_lea.vmem %s6, 2
        %v767 = vld [vmem:[%s766] ss:$8 sm:$0x3]
        %v769 = vlaneseq
        %v770 = vshrl.u32 %v769, 7
        %v771 = vsub.s32 0, %v770
        %v772 = vrot.slane %v767, %v771
        %v773 = vlaneseq
        %v774 = vshrl.u32 %v773, 7
        %v775 = vsub.s32 1, %v774
        %v776 = vrot.slane %v767, %v775
        %v779 = vmul.f32 %v765, %v772
        %v780 = vmul.f32 %v764, %v776
        %781 = vst [vmem:[#allocation2 + $0x10] sm:$0xf] %v779
        %782 = vst [vmem:[#allocation2 + $0x18] sm:$0xf] %v780
        %783 = vrot.lane.b32.xlu0 %v704, 4
        %v784 = vpop.permute.xlu0 %783
        %785 = vrot.lane.b32.xlu0 %v705, 4
        %v786 = vpop.permute.xlu0 %785
        %vm787 = vcmp.lt.s32.totalorder %v380, 4
        %v788 = vsel %vm787, %v784, %v786
        %v789 = vsel %vm787, %v786, %v784
        %s790 = scalar_lea.vmem %s6, 3
        %v791 = vld [vmem:[%s790] ss:$8 sm:$0x3]
        %v793 = vlaneseq
        %v794 = vshrl.u32 %v793, 7
        %v795 = vsub.s32 0, %v794
        %v796 = vrot.slane %v791, %v795
        %v797 = vlaneseq
        %v798 = vshrl.u32 %v797, 7
        %v799 = vsub.s32 1, %v798
        %v800 = vrot.slane %v791, %v799
        %v803 = vmul.f32 %v789, %v796
        %v804 = vmul.f32 %v788, %v800
        %v807 = vrot.slane %v803, 4
        %v808 = vrot.slane %v804, 4
        %811 = vst [vmem:[#allocation2 + $0x10] sm:$0xf0] %v807
        %812 = vst [vmem:[#allocation2 + $0x18] sm:$0xf0] %v808
        %s813 = scalar_lea.vmem %s6, 4
        %v814 = vld [vmem:[%s813] ss:$8 sm:$0x3]
        %v816 = vlaneseq
        %v817 = vshrl.u32 %v816, 7
        %v818 = vsub.s32 0, %v817
        %v819 = vrot.slane %v814, %v818
        %v820 = vlaneseq
        %v821 = vshrl.u32 %v820, 7
        %v822 = vsub.s32 1, %v821
        %v823 = vrot.slane %v814, %v822
        %v826 = vmul.f32 %v704, %v819
        %v827 = vmul.f32 %v705, %v823
        %828 = vst [vmem:[#allocation2 + $0x20] sm:$0xf] %v826
        %829 = vst [vmem:[#allocation2 + $0x28] sm:$0xf] %v827
        %830 = vrot.lane.b32.xlu0 %v704, 124
        %v831 = vpop.permute.xlu0 %830
        %832 = vrot.lane.b32.xlu0 %v705, 124
        %v833 = vpop.permute.xlu0 %832
        %vm834 = vcmp.lt.s32.totalorder %v380, 124
        %v835 = vsel %vm834, %v831, %v833
        %v836 = vsel %vm834, %v833, %v831
        %s837 = scalar_lea.vmem %s6, 5
        %v838 = vld [vmem:[%s837] ss:$8 sm:$0x3]
        %v840 = vlaneseq
        %v841 = vshrl.u32 %v840, 7
        %v842 = vsub.s32 0, %v841
        %v843 = vrot.slane %v838, %v842
        %v844 = vlaneseq
        %v845 = vshrl.u32 %v844, 7
        %v846 = vsub.s32 1, %v845
        %v847 = vrot.slane %v838, %v846
        %v850 = vmul.f32 %v835, %v843
        %v851 = vmul.f32 %v836, %v847
        %v854 = vrot.slane %v850, 4
        %v855 = vrot.slane %v851, 4
        %858 = vst [vmem:[#allocation2 + $0x20] sm:$0xf0] %v854
        %859 = vst [vmem:[#allocation2 + $0x28] sm:$0xf0] %v855
        %s860 = scalar_lea.vmem %s6, 6
        %v861 = vld [vmem:[%s860] ss:$8 sm:$0x3]
        %v863 = vlaneseq
        %v864 = vshrl.u32 %v863, 7
        %v865 = vsub.s32 0, %v864
        %v866 = vrot.slane %v861, %v865
        %v867 = vlaneseq
        %v868 = vshrl.u32 %v867, 7
        %v869 = vsub.s32 1, %v868
        %v870 = vrot.slane %v861, %v869
        %v873 = vmul.f32 %v711, %v866
        %v874 = vmul.f32 %v712, %v870
        %875 = vst [vmem:[#allocation2 + $0x30] sm:$0xf] %v873
        %876 = vst [vmem:[#allocation2 + $0x38] sm:$0xf] %v874
        %s877 = scalar_lea.vmem %s6, 7
        %v878 = vld [vmem:[%s877] ss:$8 sm:$0x3]
        %v880 = vlaneseq
        %v881 = vshrl.u32 %v880, 7
        %v882 = vsub.s32 0, %v881
        %v883 = vrot.slane %v878, %v882
        %v884 = vlaneseq
        %v885 = vshrl.u32 %v884, 7
        %v886 = vsub.s32 1, %v885
        %v887 = vrot.slane %v878, %v886
        %v890 = vmul.f32 %v734, %v883
        %v891 = vmul.f32 %v735, %v887
        %v894 = vrot.slane %v890, 4
        %v895 = vrot.slane %v891, 4
        %898 = vst [vmem:[#allocation2 + $0x30] sm:$0xf0] %v894
        %899 = vst [vmem:[#allocation2 + $0x38] sm:$0xf0] %v895
        %s900 = scalar_lea.vmem %s6, 16
        %v901 = vld [vmem:[%s900] ss:$8 sm:$0x3]
        %v903 = vlaneseq
        %v904 = vshrl.u32 %v903, 7
        %v905 = vsub.s32 0, %v904
        %v906 = vrot.slane %v901, %v905
        %v907 = vlaneseq
        %v908 = vshrl.u32 %v907, 7
        %v909 = vsub.s32 1, %v908
        %v910 = vrot.slane %v901, %v909
        %v913 = vmul.f32 %v764, %v906
        %v914 = vmul.f32 %v765, %v910
        %915 = vst [vmem:[#allocation2 + $0x40] sm:$0xf] %v913
        %916 = vst [vmem:[#allocation2 + $0x48] sm:$0xf] %v914
        %v917 = vld [vmem:[#allocation8] sm:$0xf]
        %v918 = vld [vmem:[#allocation2] sm:$0xff]
        %v919 = vld [vmem:[#allocation2 + $0x8] sm:$0xff]
        %v920 = vld [vmem:[#allocation2 + $0x10] sm:$0xff]
        %v921 = vld [vmem:[#allocation2 + $0x18] sm:$0xff]
        %v922 = vld [vmem:[#allocation2 + $0x20] sm:$0xff]
        %v923 = vld [vmem:[#allocation2 + $0x28] sm:$0xff]
        %v924 = vld [vmem:[#allocation2 + $0x30] sm:$0xff]
        %v925 = vld [vmem:[#allocation2 + $0x38] sm:$0xff]
        %v926 = vld [vmem:[#allocation2 + $0x40] sm:$0x1f]
        %v927 = vld [vmem:[#allocation2 + $0x48] sm:$0x1f]
        %v929 = vcombine.high %v342, %v342
        %v932 = vsel %vm622, %v917, 0
        %v935 = vsel %vm626, %v926, 0
        %v938 = vsel %vm626, %v927, 0
        %940 = vmatprep.subr.mxu0 %v919
        %941 = vmatpush1.msra.mxu0 %v918
        %942 = vmatprep.subr.mxu0 %v921
        %943 = vmatpush1.msra.mxu0 %v920
        %944 = vmatprep.subr.mxu0 %v923
        %945 = vmatpush1.msra.mxu0 %v922
        %946 = vmatprep.subr.mxu0 %v925
        %947 = vmatpush1.msra.mxu0 %v924
        %948 = vmatprep.subr.mxu0 %v938
        %949 = vmatpush1.msra.mxu0 %v935
        %950 = vmatprep.subr.mxu0 0.0
        %951 = vmatpush1.msra.mxu0 0.0
        %952 = vmatprep.subr.mxu0 0.0
        %953 = vmatpush1.msra.mxu0 0.0
        %954 = vmatprep.subr.mxu0 0.0
        %955 = vmatpush1.msra.mxu0 0.0
        %956 = vmatprep.subr.mxu0 0.0
        %957 = vmatpush1.msra.mxu0 0.0
        %958 = vmatprep.subr.mxu0 0.0
        %959 = vmatpush1.msra.mxu0 0.0
        %960 = vmatprep.subr.mxu0 0.0
        %961 = vmatpush1.msra.mxu0 0.0
        %962 = vmatprep.subr.mxu0 0.0
        %963 = vmatpush1.msra.mxu0 0.0
        %964 = vmatprep.subr.mxu0 0.0
        %965 = vmatpush1.msra.mxu0 0.0
        %966 = vmatprep.subr.mxu0 0.0
        %967 = vmatpush1.msra.mxu0 0.0
        %968 = vmatprep.subr.mxu0 0.0
        %969 = vmatpush1.msra.mxu0 0.0
        %970 = vmatprep.subr.mxu0 0.0
        %971 = vmatpush1.msra.mxu0 0.0
        %972 = vmatprep.subr.mxu0 0.0
        %973 = vmatpush1.msra.mxu0 0.0
        %974 = vmatprep.subr.mxu0 0.0
        %975 = vmatpush1.msra.mxu0 0.0
        %976 = vmatprep.subr.mxu0 0.0
        %977 = vmatpush1.msra.mxu0 0.0
        %978 = vmatprep.subr.mxu0 0.0
        %979 = vmatpush1.msra.mxu0 0.0
        %980 = vmatprep.subr.mxu0 0.0
        %981 = vmatpush1.msra.mxu0 0.0
        %982 = vmatprep.subr.mxu0 0.0
        %983 = vmatpush1.msra.mxu0 0.0
        %984 = vmatprep.subr.mxu0 0.0
        %985 = vmatpush1.msra.mxu0 0.0
        %986 = vmatprep.subr.mxu0 0.0
        %987 = vmatpush1.msra.mxu0 0.0
        %988 = vmatprep.subr.mxu0 0.0
        %989 = vmatpush1.msra.mxu0 0.0
        %990 = vmatprep.subr.mxu0 0.0
        %991 = vmatpush1.msra.mxu0 0.0
        %992 = vmatprep.subr.mxu0 0.0
        %993 = vmatpush1.msra.mxu0 0.0
        %994 = vmatprep.subr.mxu0 0.0
        %995 = vmatpush1.msra.mxu0 0.0
        %996 = vmatprep.subr.mxu0 0.0
        %997 = vmatpush1.msra.mxu0 0.0
        %998 = vmatprep.subr.mxu0 0.0
        %999 = vmatpush1.msra.mxu0 0.0
        %1000 = vmatprep.subr.mxu0 0.0
        %1001 = vmatpush1.msra.mxu0 0.0
        %1002 = vmatprep.subr.mxu0 0.0
        %1003 = vmatpush1.msra.mxu0 0.0
        %1004 = vmatprep.mubr.f32.mxu0 0.0
        %1005 = vmatmul.mubr.f32.gmra.mrb[0].mxu0 %v932
        %v1006 = vpop.f32.mrb[0].mxu0
        %v1007 = vadd.f32 %v342, %v1006
        %v1008 = vpop.f32.mrb[0].mxu0
        %v1009 = vadd.f32 %v929, %v1008
        %1010 = vdwg.mxu0
        %v1013 = vcombine.low %v1007, %v1009
        %1015 = vst [vmem:[%s334] sm:$0xff] %v1013
        %s1016 = sand.u32 %s186, 1
        %s1017 = scalar_lea.sflag [#allocation5], %s1016
        %s1018 = sand.u32 %s186, 1
        %s1019 = smul.addr %s1018, 8
        %s1020 = scalar_lea.vmem [#allocation11], %s1019
        // Predicated region
        $region65: #{tpu_custom_call.1} parent=47 // pred_check
          %p1021 = pneg %p196
        $region66: #{tpu_custom_call.1} parent=47 // pred_check_branch
          %1023 = sbr.rel (%p1021) target = $region68
        $region67: #{tpu_custom_call.1} parent=47 // pred_region
          %s1025 = ssub.s32 128, 128
          %1026 = vsyncadd %s1017, %s1025
          %s1027 = smul.addr %s26, 2
          %s1028 = smul.addr %s1027, 64
          %s1029 = scalar_lea.hbm %s7, %s1028
          %s1031 = sshll.u32 %s1020, 4
          %s1032 = int_to_ptr.vmem [resolvable:$true] %s1031
          %1034 = dma.vmem_to_hbm [thread:$0]  %s1032, 128, %s1029, %s1017
        $region68: #{tpu_custom_call.1} parent=47 // pred_fallthru
          _
      $region48: #{tpu_custom_call.1} parent=5 // pred_fallthru
        _
      %p1035 = scmp.le.s32.totalorder 2, %s21
      // Predicated region
      $region69: #{tpu_custom_call.1} parent=5 // pred_check
        %p1036 = pneg %p1035
      $region70: #{tpu_custom_call.1} parent=5 // pred_check_branch
        %1038 = sbr.rel (%p1036) target = $region72
      $region71: #{tpu_custom_call.1} parent=5 // pred_region
        %s1039 = ssub.s32 %s21, 2
        // Predicated region
        $region73: #{tpu_custom_call.1} parent=71 // pred_check
          %p1040 = pneg %p202
        $region74: #{tpu_custom_call.1} parent=71 // pred_check_branch
          %1042 = sbr.rel (%p1040) target = $region76
        $region75: #{tpu_custom_call.1} parent=71 // pred_region
          %s1043 = sand.u32 %s187, 1
          %s1044 = scalar_lea.sflag [#allocation5], %s1043
          %s1045 = sand.u32 %s187, 1
          %s1046 = smul.addr %s1045, 8
          %s1047 = scalar_lea.vmem [#allocation11], %s1046
          %1048 = dma.done %s1044, 128
        $region76: #{tpu_custom_call.1} parent=71 // pred_fallthru
          _
      $region72: #{tpu_custom_call.1} parent=5 // pred_fallthru
        _
    $region6: #{tpu_custom_call.1} parent=1 // loop_footer
      %s25 = sadd.s32 1, %s21
    $region7: #{tpu_custom_call.1} parent=1 // loop_footer_branch
      %20 = sbr.rel target = $region3
    $region8: #{tpu_custom_call.1} parent=1 // loop_exit
      _
    %1049 = vsyncpa [#allocation4], 1
    %s1050 = scalar_lea.sflag [#allocation4], 1
    %1051 = vsyncpa %s1050, 1
    %1052 = vsyncpa [#allocation7], 1
    %1053 = vsyncpa [#allocation10], 1
    %1054 = vsyncpa [#allocation5], 1
    %s1055 = scalar_lea.sflag [#allocation5], 1
    %1056 = vsyncpa %s1055, 1

</llo_original>
